<compile_context>
chip_gen: v5e
topology: v5e:2x2
jax: 0.10.0
libtpu: 0.0.40
codegen_flags: <defaults>
</compile_context>

<pallas_src>
import jax
import jax.numpy as jnp
from jax.experimental import pallas as pl
from jax.experimental.pallas import tpu as pltpu


# ------------------------------ Pallas kernel -------------------------------

def _fcattention_kernel(x_ref, w_ref, y_ref):
    """Fused global-average-pool + bias-free linear (the work done in forward()).

    x_ref: (N, C, H*W) f32 — spatial flattened onto the minor/lane axis
    w_ref: (Cin, Cout) f32 — nn.Linear weight, pre-transposed
    y_ref: (N, Cout)   f32
    """
    x = x_ref[...]
    pooled = jnp.mean(x, axis=-1)                      # lane reduce (XLU) -> (N, C)
    # Tiny (N x Cin) @ (Cin x Cout) contraction; one dot, negligible either way.
    y_ref[...] = jnp.dot(pooled, w_ref[...], preferred_element_type=jnp.float32)


# ------------------------------ kernel wrapper -------------------------------

def pooled_fc(x_nchw, fc_weight):
    """y = fc(avg_pool(x)) computed by a single fused pallas_call."""
    N, C, H, W = x_nchw.shape
    Cout, Cin = fc_weight.shape
    assert Cin == C, "nn.Linear(in_channels, out_channels) expects in_channels == C"
    HW = H * W

    # Lane-dense layout: flatten spatial into the minor (lane) dim (H*W = 256
    # here -> full-width vector loads); channels sit on sublanes. Free reshape.
    x_flat = x_nchw.reshape(N, C, HW)
    w_t = jnp.transpose(fc_weight)                     # (Cin, Cout), done once outside

    y = pl.pallas_call(
        _fcattention_kernel,
        grid=(1,),  # whole problem in one grid step: single launch, data stays in VMEM
        in_specs=[
            pl.BlockSpec((N, C, HW), lambda i: (0, 0, 0)),
            pl.BlockSpec((Cin, Cout), lambda i: (0, 0)),
        ],
        out_specs=pl.BlockSpec((N, Cout), lambda i: (0, 0)),
        out_shape=jax.ShapeDtypeStruct((N, Cout), jnp.float32),
        compiler_params=pltpu.CompilerParams(dimension_semantics=("arbitrary",)),
    )(x_flat, w_t)
    return y


def fcattention_forward(x_nchw, fc_weight):
    """Matches fcattention.forward: computes y = fc(avg_pool(x)) via the fused
    Pallas kernel, then returns x unchanged (the module discards y)."""
    y = pooled_fc(x_nchw, fc_weight)
    return x_nchw, y


# ---------------------------------- main -------------------------------------

if __name__ == "__main__":
    key = jax.random.PRNGKey(0)
    kx, kw = jax.random.split(key)

    # .view(b, c, 1, 1) in forward implies out_channels == in_channels.
    N, C, H, W = 2, 16, 16, 16
    x = jax.random.normal(kx, (N, C, H, W), jnp.float32)          # NCHW, like PyTorch
    fc_w = jax.random.normal(kw, (C, C), jnp.float32) / jnp.sqrt(C)  # nn.Linear.weight (out, in)

    out, y = fcattention_forward(x, fc_w)
    out = jax.block_until_ready(out)
    y = jax.block_until_ready(y)

    # Module semantics: output is the input, unchanged.
    assert out.shape == (N, C, H, W)
    assert bool(jnp.all(out == x))

    # Verify the fused pooled-FC kernel against a pure-JAX reference.
    y_ref = jnp.mean(x, axis=(2, 3)) @ fc_w.T
    assert y.shape == (N, C)
    assert bool(jnp.all(jnp.isfinite(y)))
    assert bool(jnp.allclose(y, y_ref, atol=1e-5, rtol=1e-5))

    print("KERNEL_OK")
</pallas_src>

<mosaic_0001>
module attributes {stable_mosaic.version = 11 : i64} {
  func.func @_fcattention_kernel(%arg0: i32, %arg1: memref<2x16x256xf32, #tpu.memory_space<vmem>>, %arg2: memref<16x16xf32, #tpu.memory_space<vmem>>, %arg3: memref<2x16xf32, #tpu.memory_space<vmem>>) attributes {dimension_semantics = [#tpu.dimension_semantics<arbitrary>], iteration_bounds = array<i64: 1>, scalar_prefetch = 0 : i64, scratch_operands = 0 : i64, tpu.core_type = #tpu.core_type<tc>, window_params = [{pipeline_mode = #tpu.pipeline_mode<synchronous>, transform_indices = @transform_0, window_bounds = array<i64: 2, 16, 256>}, {pipeline_mode = #tpu.pipeline_mode<synchronous>, transform_indices = @transform_1, window_bounds = array<i64: 16, 16>}, {pipeline_mode = #tpu.pipeline_mode<synchronous>, transform_indices = @transform_2, window_bounds = array<i64: 2, 16>}]} {
    %c0 = arith.constant 0 : index
    %c0_0 = arith.constant 0 : index
    %c0_1 = arith.constant 0 : index
    %0 = vector.load %arg1[%c0, %c0_0, %c0_1] : memref<2x16x256xf32, #tpu.memory_space<vmem>>, vector<2x16x256xf32>
    %cst = arith.constant dense<0.000000e+00> : vector<2x16xf32>
    %1 = vector.multi_reduction <add>, %0, %cst [2] : vector<2x16x256xf32> to vector<2x16xf32>
    %cst_2 = arith.constant 2.560000e+02 : f32
    %2 = vector.broadcast %cst_2 : f32 to vector<2x16xf32>
    %3 = arith.divf %1, %2 : vector<2x16xf32>
    %c0_3 = arith.constant 0 : index
    %c0_4 = arith.constant 0 : index
    %4 = vector.load %arg2[%c0_3, %c0_4] : memref<16x16xf32, #tpu.memory_space<vmem>>, vector<16x16xf32>
    %cst_5 = arith.constant dense<0.000000e+00> : vector<2x16xf32>
    %5 = tpu.matmul %3, %4, %cst_5 {dimension_numbers = #tpu.dot_dimension_numbers<[1], [0], [0], [1], [0, 0, 1, 1], [], []>} : vector<2x16xf32>, vector<16x16xf32>, vector<2x16xf32> -> vector<2x16xf32>
    %c0_6 = arith.constant 0 : index
    %c0_7 = arith.constant 0 : index
    %6 = vector.load %arg3[%c0_6, %c0_7] : memref<2x16xf32, #tpu.memory_space<vmem>>, vector<2x16xf32>
    tpu.vector_store %arg3[%c0_6, %c0_7], %5 {strides = array<i32>} : memref<2x16xf32, #tpu.memory_space<vmem>>, vector<2x16xf32>,
    return
  }
  func.func @transform_0(%arg0: i32) -> (i32, i32, i32) {
    %c0_i32 = arith.constant 0 : i32
    %c0_i32_0 = arith.constant 0 : i32
    %c0_i32_1 = arith.constant 0 : i32
    %c0_i32_2 = arith.constant 0 : i32
    return %c0_i32, %c0_i32_0, %c0_i32_1 : i32, i32, i32
  }
  func.func @transform_1(%arg0: i32) -> (i32, i32) {
    %c0_i32 = arith.constant 0 : i32
    %c0_i32_0 = arith.constant 0 : i32
    %c0_i32_1 = arith.constant 0 : i32
    return %c0_i32, %c0_i32_0 : i32, i32
  }
  func.func @transform_2(%arg0: i32) -> (i32, i32) {
    %c0_i32 = arith.constant 0 : i32
    %c0_i32_0 = arith.constant 0 : i32
    %c0_i32_1 = arith.constant 0 : i32
    return %c0_i32, %c0_i32_0 : i32, i32
  }
}

</mosaic_0001>

<llo_original>
// kernel: tpu_custom_call.1
$region0: #{tpu_custom_call.1}
  #allocation0 [shape = 'u32[]', space=smem, size = 0x4, offset = 0x4, fixed_abs, tag = 'smem constant byte address 0x4 - core index']
  #allocation1 [shape = 'u32[72,128]{1,0:T(1,128)}', space=vmem, size = 0x9000, scoped, tag = 'internal scratch']
  %s0 = inlined_call_operand.hbm [shape: f32[2,16,256], index: 0, kind: input, shape index: {}]
  %s1 = inlined_call_operand.hbm [shape: f32[16,16], index: 1, kind: input, shape index: {}]
  %s2 = inlined_call_operand.hbm [shape: f32[2,16], index: 2, kind: output, shape index: {}]
  %s3 = sld [smem:[#allocation0]]
  $region26: #{tpu_custom_call.1} parent=0
    _
  %s5 = ssub.s32 1, %s3
  %s6 = scalar_select 0, %s5, %s3
  $region1: #{tpu_custom_call.1} parent=0
    #allocation2 [shape = 'u8[32768]{0}', space=vmem, size = 0x8000, scoped, tag = 'input window, operand 0, single buffered']
    #allocation3 [shape = 's32[1]{0}', space=sflag, size = 0x4, scoped, tag = 'scoped memory for tpu_custom_call.1']
    #allocation4 [shape = 's32[1]{0}', space=sflag, size = 0x4, scoped, tag = 'scoped memory for tpu_custom_call.1']
    #allocation5 [shape = 'u8[8192]{0}', space=vmem, size = 0x2000, scoped, tag = 'input window, operand 1, single buffered']
    #allocation6 [shape = 's32[1]{0}', space=sflag, size = 0x4, scoped, tag = 'scoped memory for tpu_custom_call.1']
    #allocation7 [shape = 'u8[1024]{0}', space=vmem, size = 0x400, scoped, tag = 'output window, operand 0, single buffered']
    %7 = vsyncpa [#allocation3], 0
    %8 = vsyncpa [#allocation6], 0
    %9 = vsyncpa [#allocation4], 0
    // Predicated region
    $region2: #{tpu_custom_call.1} parent=1 // pred_check
      _
    $region3: #{tpu_custom_call.1} parent=1 // pred_check_branch
      %11 = sbr.rel (0) target = $region5
    $region4: #{tpu_custom_call.1} parent=1 // pred_region
      %13 = vsyncadd [#allocation3], 0
      %s14 = sshll.u32 %s0, 4
      %s15 = int_to_ptr.hbm [resolvable:$true] %s14
      %s16 = sshll.u32 [#allocation2], 4
      %s17 = int_to_ptr.vmem [resolvable:$true] %s16
      %22 = dma.hbm_to_vmem [thread:$0]  %s15, 1024, %s17, [#allocation3], 256, 256, 16
    $region5: #{tpu_custom_call.1} parent=1 // pred_fallthru
      _
    // Predicated region
    $region6: #{tpu_custom_call.1} parent=1 // pred_check
      _
    $region7: #{tpu_custom_call.1} parent=1 // pred_check_branch
      %24 = sbr.rel (0) target = $region9
    $region8: #{tpu_custom_call.1} parent=1 // pred_region
      %26 = vsyncadd [#allocation6], 0
      %s27 = sshll.u32 %s1, 4
      %s28 = int_to_ptr.hbm [resolvable:$true] %s27
      %s29 = sshll.u32 [#allocation5], 4
      %s30 = int_to_ptr.vmem [resolvable:$true] %s29
      %35 = dma.hbm_to_vmem [thread:$0]  %s28, 256, %s30, [#allocation6], 128, 128, 8
    $region9: #{tpu_custom_call.1} parent=1 // pred_fallthru
      _
    // Predicated region
    $region10: #{tpu_custom_call.1} parent=1 // pred_check
      _
    $region11: #{tpu_custom_call.1} parent=1 // pred_check_branch
      %37 = sbr.rel (0) target = $region13
    $region12: #{tpu_custom_call.1} parent=1 // pred_region
      %39 = dma.done [#allocation3], 1024
    $region13: #{tpu_custom_call.1} parent=1 // pred_fallthru
      _
    // Predicated region
    $region14: #{tpu_custom_call.1} parent=1 // pred_check
      _
    $region15: #{tpu_custom_call.1} parent=1 // pred_check_branch
      %41 = sbr.rel (0) target = $region17
    $region16: #{tpu_custom_call.1} parent=1 // pred_region
      %43 = dma.done [#allocation6], 256
    $region17: #{tpu_custom_call.1} parent=1 // pred_fallthru
      _
    %v44 = vld [vmem:[#allocation2] sm:$0xff]
    %v45 = vld [vmem:[#allocation2 + $0x8] sm:$0xff]
    %v46 = vld [vmem:[#allocation2 + $0x10] sm:$0xff]
    %v47 = vld [vmem:[#allocation2 + $0x18] sm:$0xff]
    %v48 = vld [vmem:[#allocation2 + $0x20] sm:$0xff]
    %v49 = vld [vmem:[#allocation2 + $0x28] sm:$0xff]
    %v50 = vld [vmem:[#allocation2 + $0x30] sm:$0xff]
    %v51 = vld [vmem:[#allocation2 + $0x38] sm:$0xff]
    %v52 = vadd.f32 %v44, %v45
    %53 = vadd.xlane.f32.xlu0 %v52
    %v54 = vpop.xlane.xlu0 %53
    %v55 = vadd.f32 %v46, %v47
    %56 = vadd.xlane.f32.xlu0 %v55
    %v57 = vpop.xlane.xlu0 %56
    %v58 = vadd.f32 %v48, %v49
    %59 = vadd.xlane.f32.xlu0 %v58
    %v60 = vpop.xlane.xlu0 %59
    %v61 = vadd.f32 %v50, %v51
    %62 = vadd.xlane.f32.xlu0 %v61
    %v63 = vpop.xlane.xlu0 %62
    %v64 = vrcp.pop 256.0
    %v65 = vmul.f32 256.0, %v64
    %v66 = vsub.f32 1.0, %v65
    %v67 = vmul.f32 %v64, %v66
    %v68 = vadd.f32 %v64, %v67
    %vm69 = vweird.f32 %v64
    %v70 = vsel %vm69, %v64, %v68
    %v71 = vmul.f32 %v54, %v70
    %v72 = vmul.f32 %v57, %v70
    %v73 = vmul.f32 %v60, %v70
    %v74 = vmul.f32 %v63, %v70
    %v75 = vld [vmem:[#allocation5] sm:$0xff]
    %v76 = vld [vmem:[#allocation5 + $0x8] sm:$0xff]
    %v81 = vlaneseq
    %v82 = vand.u32 %v81, 127
    %v83 = vperm.slane %v71, %v82
    %v84 = vadd.s32 %v82, 4294967288
    %v85 = vperm.slane %v72, %v84
    %vm86 = vcmask 130112
    %v87 = vsel %vm86, %v85, %v83
    %v88 = vperm.slane %v73, %v82
    %v89 = vperm.slane %v74, %v84
    %v90 = vsel %vm86, %v89, %v88
    %vm91 = vcmask 1041409
    %v92 = vsel %vm91, %v90, %v87
    %vm93 = vcmask 130048
    %v94 = vsel %vm93, %v92, 0
    %96 = vmatpush.msra.mxu0 0.0
    %97 = vmatpush.msra.mxu0 0.0
    %98 = vmatpush.msra.mxu0 0.0
    %99 = vmatpush.msra.mxu0 0.0
    %100 = vmatpush.msra.mxu0 0.0
    %101 = vmatpush.msra.mxu0 0.0
    %102 = vmatpush.msra.mxu0 0.0
    %103 = vmatpush.msra.mxu0 0.0
    %104 = vmatpush.msra.mxu0 0.0
    %105 = vmatpush.msra.mxu0 0.0
    %106 = vmatpush.msra.mxu0 0.0
    %107 = vmatpush.msra.mxu0 0.0
    %108 = vmatpush.msra.mxu0 0.0
    %109 = vmatpush.msra.mxu0 0.0
    %110 = vmatpush.msra.mxu0 %v76
    %111 = vmatpush.msra.mxu0 %v75
    %112 = vmatmul.f32.gmra.mxu0 %v94
    %v113 = vpop.f32.mrf.mxu0
    %v114 = vadd.f32 0.0, %v113
    %115 = vdwg.mxu0
    %vm116 = vcmask 123904
    %117 = vst.msk [vmem:[#allocation7] sm:$0x3] %vm116, %v114
    // Predicated region
    $region18: #{tpu_custom_call.1} parent=1 // pred_check
      _
    $region19: #{tpu_custom_call.1} parent=1 // pred_check_branch
      %119 = sbr.rel (0) target = $region21
    $region20: #{tpu_custom_call.1} parent=1 // pred_region
      %121 = vsyncadd [#allocation4], 0
      %s123 = sshll.u32 [#allocation7], 4
      %s124 = int_to_ptr.vmem [resolvable:$true] %s123
      %s125 = sshll.u32 %s2, 4
      %s126 = int_to_ptr.hbm [resolvable:$true] %s125
      %128 = dma.vmem_to_hbm [thread:$0]  %s124, 32, %s126, [#allocation4]
    $region21: #{tpu_custom_call.1} parent=1 // pred_fallthru
      _
    // Predicated region
    $region22: #{tpu_custom_call.1} parent=1 // pred_check
      _
    $region23: #{tpu_custom_call.1} parent=1 // pred_check_branch
      %130 = sbr.rel (0) target = $region25
    $region24: #{tpu_custom_call.1} parent=1 // pred_region
      %132 = dma.done [#allocation4], 32
    $region25: #{tpu_custom_call.1} parent=1 // pred_fallthru
      _
    %133 = vsyncpa [#allocation3], 1
    %134 = vsyncpa [#allocation6], 1
    %135 = vsyncpa [#allocation4], 1

</llo_original>
